<compile_context>
chip_gen: v5e
topology: v5e:2x2
jax: 0.10.0
libtpu: 0.0.40
codegen_flags: <defaults>
</compile_context>

<pallas_src>
import jax
import jax.numpy as jnp
from jax.experimental import pallas as pl
from jax.experimental.pallas import tpu as pltpu
import numpy as np


def _fc_tanh_kernel(x_ref, w_ref, b_ref, o_ref, acc_ref):
    """Compute one (tm, tn) output tile, accumulating over the K grid axis."""
    k = pl.program_id(2)

    @pl.when(k == 0)
    def _():
        acc_ref[...] = jnp.zeros_like(acc_ref)

    acc_ref[...] += jnp.dot(x_ref[...], w_ref[...],
                            preferred_element_type=jnp.float32)

    @pl.when(k == pl.num_programs(2) - 1)
    def _():
        o_ref[...] = jnp.tanh(acc_ref[...] + b_ref[...]).astype(o_ref.dtype)


def _pick_tile(dim, grain, cap):
    """Largest multiple of `grain` that divides `dim` and is <= `cap`.
    Falls back to the full dim (always a legal block size) if `dim` is not
    a multiple of `grain`."""
    if dim % grain != 0:
        return dim
    best = grain
    t = grain
    while t <= min(dim, cap):
        if dim % t == 0:
            best = t
        t += grain
    return best


def image_encoder_fc(features, w_fc, b_fc, *, tk_cap=2048, tn_cap=512):
    """features: (B, C, H, W) feature map (ResNet-152 layer4 output).
       w_fc:     (C*H*W, output_size) -- PyTorch Linear weight pre-transposed.
       b_fc:     (1, output_size).
       Returns tanh(flatten(features) @ w_fc + b_fc) with shape (B, output_size).
    """
    B = features.shape[0]
    # Same row-major flatten as torch `.view(B, -1)`; contiguous reshape, no copy.
    x = features.reshape(B, -1)
    K, N = w_fc.shape
    assert x.shape[1] == K, (x.shape, w_fc.shape)

    tm = B                              # batch is small -> keep it whole
    tn = _pick_tile(N, 128, tn_cap)     # lane-dense (>=128-wide) output stores
    tk = _pick_tile(K, 128, tk_cap)     # 128-aligned reduction chunks

    grid = (B // tm, N // tn, K // tk)

    return pl.pallas_call(
        _fc_tanh_kernel,
        out_shape=jax.ShapeDtypeStruct((B, N), features.dtype),
        grid_spec=pltpu.PrefetchScalarGridSpec(
            num_scalar_prefetch=0,
            grid=grid,
            in_specs=[
                pl.BlockSpec((tm, tk), lambda i, j, k: (i, k)),   # x tile
                pl.BlockSpec((tk, tn), lambda i, j, k: (k, j)),   # W tile
                pl.BlockSpec((1, tn), lambda i, j, k: (0, j)),    # bias tile
            ],
            out_specs=pl.BlockSpec((tm, tn), lambda i, j, k: (i, j)),
            scratch_shapes=[pltpu.VMEM((tm, tn), jnp.float32)],
        ),
        compiler_params=pltpu.CompilerParams(
            # reduction axis last & sequential; M/N tiles can shard across cores
            dimension_semantics=("parallel", "parallel", "arbitrary"),
        ),
    )(x, w_fc, b_fc)


def image_encoder_fc_ref(features, w_fc, b_fc):
    """Pure-JAX reference matching the PyTorch flatten + Linear + Tanh."""
    B = features.shape[0]
    x = features.reshape(B, -1)
    return jnp.tanh(x @ w_fc + b_fc)


if __name__ == "__main__":
    # Small stand-in shapes consistent with the module:
    # real module has features (B, 2048, 14, 14) and Linear(14*14*2048 -> 2048);
    # here we use (B=2, C=32, 14, 14) -> K = 6272 and output_size = 256.
    B, C, S, OUT = 2, 32, 14, 256
    K = C * S * S

    key = jax.random.PRNGKey(0)
    k_feat, k_w, k_b = jax.random.split(key, 3)

    # TODO(synk): the frozen, pretrained ResNet-152 backbone (models.resnet152)
    # has no self-contained Pallas equivalent (requires external pretrained
    # weights); the kernel consumes its (B, C, 14, 14) feature map directly.
    features = jax.random.normal(k_feat, (B, C, S, S), jnp.float32)

    scale = 1.0 / np.sqrt(K)
    w_fc = jax.random.uniform(k_w, (K, OUT), jnp.float32, -scale, scale)
    b_fc = jax.random.uniform(k_b, (1, OUT), jnp.float32, -scale, scale)

    out = jax.block_until_ready(image_encoder_fc(features, w_fc, b_fc))
    ref = jax.block_until_ready(image_encoder_fc_ref(features, w_fc, b_fc))

    np.testing.assert_allclose(np.asarray(out), np.asarray(ref),
                               rtol=2e-3, atol=2e-3)
    print("KERNEL_OK")
</pallas_src>

<mosaic_0001>
module attributes {stable_mosaic.version = 11 : i64} {
  func.func @_fc_tanh_kernel(%arg0: i32, %arg1: i32, %arg2: i32, %arg3: memref<2x896xf32, #tpu.memory_space<vmem>>, %arg4: memref<896x256xf32, #tpu.memory_space<vmem>>, %arg5: memref<1x256xf32, #tpu.memory_space<vmem>>, %arg6: memref<2x256xf32, #tpu.memory_space<vmem>>, %arg7: memref<2x256xf32, #tpu.memory_space<vmem>>) attributes {dimension_semantics = [#tpu.dimension_semantics<parallel>, #tpu.dimension_semantics<parallel>, #tpu.dimension_semantics<arbitrary>], iteration_bounds = array<i64: 1, 1, 7>, scalar_prefetch = 0 : i64, scratch_operands = 1 : i64, tpu.core_type = #tpu.core_type<tc>, window_params = [{transform_indices = @transform_0, window_bounds = array<i64: 2, 896>}, {transform_indices = @transform_1, window_bounds = array<i64: 896, 256>}, {transform_indices = @transform_2, window_bounds = array<i64: 1, 256>}, {transform_indices = @transform_3, window_bounds = array<i64: 2, 256>}]} {
    %c0_i32 = arith.constant 0 : i32
    %0 = arith.cmpi eq, %arg2, %c0_i32 : i32
    %1 = arith.extui %0 : i1 to i32
    %c0_i32_0 = arith.constant 0 : i32
    %2 = arith.cmpi ne, %1, %c0_i32_0 : i32
    scf.if %2 {
      %cst_9 = arith.constant 0.000000e+00 : f32
      %12 = vector.broadcast %cst_9 : f32 to vector<2x256xf32>
      %c0_10 = arith.constant 0 : index
      %c0_11 = arith.constant 0 : index
      %13 = vector.load %arg7[%c0_10, %c0_11] : memref<2x256xf32, #tpu.memory_space<vmem>>, vector<2x256xf32>
      tpu.vector_store %arg7[%c0_10, %c0_11], %12 {strides = array<i32>} : memref<2x256xf32, #tpu.memory_space<vmem>>, vector<2x256xf32>,
    } else {
    }
    %c0 = arith.constant 0 : index
    %c0_1 = arith.constant 0 : index
    %3 = vector.load %arg7[%c0, %c0_1] : memref<2x256xf32, #tpu.memory_space<vmem>>, vector<2x256xf32>
    %c0_2 = arith.constant 0 : index
    %c0_3 = arith.constant 0 : index
    %4 = vector.load %arg3[%c0_2, %c0_3] : memref<2x896xf32, #tpu.memory_space<vmem>>, vector<2x896xf32>
    %c0_4 = arith.constant 0 : index
    %c0_5 = arith.constant 0 : index
    %5 = vector.load %arg4[%c0_4, %c0_5] : memref<896x256xf32, #tpu.memory_space<vmem>>, vector<896x256xf32>
    %cst = arith.constant dense<0.000000e+00> : vector<2x256xf32>
    %6 = tpu.matmul %4, %5, %cst {dimension_numbers = #tpu.dot_dimension_numbers<[1], [0], [0], [1], [0, 0, 1, 1], [], []>} : vector<2x896xf32>, vector<896x256xf32>, vector<2x256xf32> -> vector<2x256xf32>
    %7 = arith.addf %3, %6 : vector<2x256xf32>
    %c0_6 = arith.constant 0 : index
    %c0_7 = arith.constant 0 : index
    %8 = vector.load %arg7[%c0_6, %c0_7] : memref<2x256xf32, #tpu.memory_space<vmem>>, vector<2x256xf32>
    tpu.vector_store %arg7[%c0_6, %c0_7], %7 {strides = array<i32>} : memref<2x256xf32, #tpu.memory_space<vmem>>, vector<2x256xf32>,
    %c6_i32 = arith.constant 6 : i32
    %9 = arith.cmpi eq, %arg2, %c6_i32 : i32
    %10 = arith.extui %9 : i1 to i32
    %c0_i32_8 = arith.constant 0 : i32
    %11 = arith.cmpi ne, %10, %c0_i32_8 : i32
    scf.if %11 {
      %c0_9 = arith.constant 0 : index
      %c0_10 = arith.constant 0 : index
      %12 = vector.load %arg7[%c0_9, %c0_10] : memref<2x256xf32, #tpu.memory_space<vmem>>, vector<2x256xf32>
      %c0_11 = arith.constant 0 : index
      %c0_12 = arith.constant 0 : index
      %13 = vector.load %arg5[%c0_11, %c0_12] : memref<1x256xf32, #tpu.memory_space<vmem>>, vector<1x256xf32>
      %14 = vector.broadcast %13 : vector<1x256xf32> to vector<2x256xf32>
      %15 = arith.addf %12, %14 : vector<2x256xf32>
      %16 = math.tanh %15 : vector<2x256xf32>
      %c0_13 = arith.constant 0 : index
      %c0_14 = arith.constant 0 : index
      %17 = vector.load %arg6[%c0_13, %c0_14] : memref<2x256xf32, #tpu.memory_space<vmem>>, vector<2x256xf32>
      tpu.vector_store %arg6[%c0_13, %c0_14], %16 {strides = array<i32>} : memref<2x256xf32, #tpu.memory_space<vmem>>, vector<2x256xf32>,
    } else {
    }
    return
  }
  func.func @transform_0(%arg0: i32, %arg1: i32, %arg2: i32) -> (i32, i32) {
    %c0_i32 = arith.constant 0 : i32
    return %arg0, %arg2 : i32, i32
  }
  func.func @transform_1(%arg0: i32, %arg1: i32, %arg2: i32) -> (i32, i32) {
    %c0_i32 = arith.constant 0 : i32
    return %arg2, %arg1 : i32, i32
  }
  func.func @transform_2(%arg0: i32, %arg1: i32, %arg2: i32) -> (i32, i32) {
    %c0_i32 = arith.constant 0 : i32
    %c0_i32_0 = arith.constant 0 : i32
    return %c0_i32, %arg1 : i32, i32
  }
  func.func @transform_3(%arg0: i32, %arg1: i32, %arg2: i32) -> (i32, i32) {
    %c0_i32 = arith.constant 0 : i32
    return %arg0, %arg1 : i32, i32
  }
}

</mosaic_0001>

<llo_original>
// kernel: tpu_custom_call.1
$region0: #{tpu_custom_call.1}
  #allocation0 [shape = 'u32[]', space=smem, size = 0x4, offset = 0x4, fixed_abs, tag = 'smem constant byte address 0x4 - core index']
  #allocation1 [shape = 'u32[72,128]{1,0:T(1,128)}', space=vmem, size = 0x9000, scoped, tag = 'internal scratch']
  #allocation2 [shape = 'f32[2,256]{1,0:T(2,128)}', space=vmem, size = 0x800, scoped, tag = 'scratch operand']
  %s0 = inlined_call_operand.hbm [shape: f32[2,6272], index: 0, kind: input, shape index: {}]
  %s1 = inlined_call_operand.hbm [shape: f32[6272,256], index: 1, kind: input, shape index: {}]
  %s2 = inlined_call_operand.hbm [shape: f32[1,256], index: 2, kind: input, shape index: {}]
  %s3 = inlined_call_operand.hbm [shape: f32[2,256], index: 3, kind: output, shape index: {}]
  %s4 = sld [smem:[#allocation0]]
  $region65: #{tpu_custom_call.1} parent=0
    _
  %s6 = ssub.s32 1, %s4
  %s7 = scalar_select 0, %s6, %s4
  $region1: #{tpu_custom_call.1} parent=0
    #allocation3 [shape = 'u8[14336]{0}', space=vmem, size = 0x3800, scoped, tag = 'input window, operand 0']
    #allocation4 [shape = 's32[2]{0}', space=sflag, size = 0x8, scoped, tag = 'scoped memory for tpu_custom_call.1']
    #allocation5 [shape = 's32[2]{0}', space=sflag, size = 0x8, scoped, tag = 'scoped memory for tpu_custom_call.1']
    #allocation6 [shape = 'u8[1835008]{0}', space=vmem, size = 0x1c0000, scoped, tag = 'input window, operand 1']
    #allocation7 [shape = 's32[2]{0}', space=sflag, size = 0x8, scoped, tag = 'scoped memory for tpu_custom_call.1']
    #allocation8 [shape = 'u8[1024]{0}', space=vmem, size = 0x400, scoped, tag = 'input window, operand 2, single buffered']
    #allocation9 [shape = 'u8[2048]{0}', space=vmem, size = 0x800, scoped, tag = 'output window, operand 0, single buffered']
    %8 = vsyncpa [#allocation4], 0
    %s9 = scalar_lea.sflag [#allocation4], 1
    %10 = vsyncpa %s9, 0
    %11 = vsyncpa [#allocation7], 0
    %s12 = scalar_lea.sflag [#allocation7], 1
    %13 = vsyncpa %s12, 0
    %14 = vsyncpa [#allocation5], 0
    loop: start=0, step=1, limit=9
    $region2: #{tpu_custom_call.1} parent=1 // loop_pre_header
      _
    $region3: #{tpu_custom_call.1} parent=1 // loop_header
      %s16 = sphi 0, %s20
      %p17 = scmp.ge.s32.totalorder %s16, 9
      %s23 = sphi 0, %s42
      %s24 = sphi 0, %s38
      %s25 = sphi 0, %s34
      %s26 = sphi 0, %s23
      %s27 = sphi 0, %s24
      %s28 = sphi 0, %s25
      %s29 = sphi 0, %s26
      %s30 = sphi 0, %s27
      %s31 = sphi 0, %s28
      %s47 = sphi 0, %s49
      %s50 = sphi 0, %s47
      %s51 = sphi 0, %s50
      %s67 = sphi 0, %s51
      %s75 = sphi 0, %s77
      %s78 = sphi 0, %s75
      %s79 = sphi 0, %s78
      %s95 = sphi 0, %s79
      %s101 = sphi 0, %s103
      %s104 = sphi 0, %s101
      %s105 = sphi 0, %s104
      %s121 = sphi 0, %s105
      %s129 = sphi 0, %s131
      %s132 = sphi 0, %s129
      %s133 = sphi 0, %s132
      %s149 = sphi 0, %s133
    $region4: #{tpu_custom_call.1} parent=1 // loop_header_branch
      %19 = sbr.rel (%p17) target = $region8
    $region5: #{tpu_custom_call.1} parent=1 // loop_body
      %s21 = ssub.s32 %s16, 1
      %s22 = ssub.s32 %s16, 2
      %s32 = sadd.s32 1, %s25
      %p33 = scmp.ge.s32.totalorder %s32, 7
      %s34 = scalar_select %p33, 0, %s32
      %s35 = sadd.s32 1, %s24
      %s36 = scalar_select %p33, %s35, %s24
      %p37 = scmp.ge.s32.totalorder %s36, 1
      %s38 = scalar_select %p37, 0, %s36
      %s39 = sadd.s32 1, %s23
      %s40 = scalar_select %p37, %s39, %s23
      %p41 = scmp.ge.s32.totalorder %s40, 1
      %s42 = scalar_select %p41, 0, %s40
      %s43 = ssub.s32 %s23, %s42
      %s44 = ssub.s32 %s25, %s34
      %s45 = sor.u32 %s43, %s44
      %p46 = scmp.eq.s32.totalorder %s45, 0
      %s48 = sadd.s32 %s47, 1
      %s49 = scalar_select %p46, %s47, %s48
      %p52 = pneg %p46
      %p53 = scmp.eq.s32.totalorder %s16, 6
      %p54 = por %p52, %p53
      %p55 = scmp.ne.s32.totalorder %s47, %s50
      %p56 = scmp.eq.s32.totalorder %s16, 0
      %p57 = por %p55, %p56
      %p58 = scmp.ne.s32.totalorder %s47, %s50
      %p59 = scmp.eq.s32.totalorder %s21, 6
      %p60 = por %p58, %p59
      %p61 = scmp.ne.s32.totalorder %s50, %s51
      %p62 = scmp.eq.s32.totalorder %s21, 0
      %p63 = por %p61, %p62
      %p64 = scmp.ne.s32.totalorder %s50, %s51
      %p65 = scmp.eq.s32.totalorder %s22, 6
      %p66 = por %p64, %p65
      %p68 = scmp.ne.s32.totalorder %s51, %s67
      %p69 = scmp.eq.s32.totalorder %s22, 0
      %p70 = por %p68, %p69
      %s71 = ssub.s32 %s25, %s34
      %s72 = ssub.s32 %s24, %s38
      %s73 = sor.u32 %s71, %s72
      %p74 = scmp.eq.s32.totalorder %s73, 0
      %s76 = sadd.s32 %s75, 1
      %s77 = scalar_select %p74, %s75, %s76
      %p80 = pneg %p74
      %p81 = scmp.eq.s32.totalorder %s16, 6
      %p82 = por %p80, %p81
      %p83 = scmp.ne.s32.totalorder %s75, %s78
      %p84 = scmp.eq.s32.totalorder %s16, 0
      %p85 = por %p83, %p84
      %p86 = scmp.ne.s32.totalorder %s75, %s78
      %p87 = scmp.eq.s32.totalorder %s21, 6
      %p88 = por %p86, %p87
      %p89 = scmp.ne.s32.totalorder %s78, %s79
      %p90 = scmp.eq.s32.totalorder %s21, 0
      %p91 = por %p89, %p90
      %p92 = scmp.ne.s32.totalorder %s78, %s79
      %p93 = scmp.eq.s32.totalorder %s22, 6
      %p94 = por %p92, %p93
      %p96 = scmp.ne.s32.totalorder %s79, %s95
      %p97 = scmp.eq.s32.totalorder %s22, 0
      %p98 = por %p96, %p97
      %s99 = ssub.s32 %s24, %s38
      %p100 = scmp.eq.s32.totalorder %s99, 0
      %s102 = sadd.s32 %s101, 1
      %s103 = scalar_select %p100, %s101, %s102
      %p106 = pneg %p100
      %p107 = scmp.eq.s32.totalorder %s16, 6
      %p108 = por %p106, %p107
      %p109 = scmp.ne.s32.totalorder %s101, %s104
      %p110 = scmp.eq.s32.totalorder %s16, 0
      %p111 = por %p109, %p110
      %p112 = scmp.ne.s32.totalorder %s101, %s104
      %p113 = scmp.eq.s32.totalorder %s21, 6
      %p114 = por %p112, %p113
      %p115 = scmp.ne.s32.totalorder %s104, %s105
      %p116 = scmp.eq.s32.totalorder %s21, 0
      %p117 = por %p115, %p116
      %p118 = scmp.ne.s32.totalorder %s104, %s105
      %p119 = scmp.eq.s32.totalorder %s22, 6
      %p120 = por %p118, %p119
      %p122 = scmp.ne.s32.totalorder %s105, %s121
      %p123 = scmp.eq.s32.totalorder %s22, 0
      %p124 = por %p122, %p123
      %s125 = ssub.s32 %s23, %s42
      %s126 = ssub.s32 %s24, %s38
      %s127 = sor.u32 %s125, %s126
      %p128 = scmp.eq.s32.totalorder %s127, 0
      %s130 = sadd.s32 %s129, 1
      %s131 = scalar_select %p128, %s129, %s130
      %p134 = pneg %p128
      %p135 = scmp.eq.s32.totalorder %s16, 6
      %p136 = por %p134, %p135
      %p137 = scmp.ne.s32.totalorder %s129, %s132
      %p138 = scmp.eq.s32.totalorder %s16, 0
      %p139 = por %p137, %p138
      %p140 = scmp.ne.s32.totalorder %s129, %s132
      %p141 = scmp.eq.s32.totalorder %s21, 6
      %p142 = por %p140, %p141
      %p143 = scmp.ne.s32.totalorder %s132, %s133
      %p144 = scmp.eq.s32.totalorder %s21, 0
      %p145 = por %p143, %p144
      %p146 = scmp.ne.s32.totalorder %s132, %s133
      %p147 = scmp.eq.s32.totalorder %s22, 6
      %p148 = por %p146, %p147
      %p150 = scmp.ne.s32.totalorder %s133, %s149
      %p151 = scmp.eq.s32.totalorder %s22, 0
      %p152 = por %p150, %p151
      %p153 = scmp.le.s32.totalorder 1, %s16
      %p154 = scmp.lt.s32.totalorder %s16, 8
      %p155 = pnand %p153, %p154
      %p156 = pneg %p155
      // Predicated region
      $region9: #{tpu_custom_call.1} parent=5 // pred_check
        _
      $region10: #{tpu_custom_call.1} parent=5 // pred_check_branch
        %158 = sbr.rel (%p155) target = $region12
      $region11: #{tpu_custom_call.1} parent=5 // pred_region
        %s159 = ssub.s32 %s16, 1
        // Predicated region
        $region13: #{tpu_custom_call.1} parent=11 // pred_check
          %p160 = pneg %p117
        $region14: #{tpu_custom_call.1} parent=11 // pred_check_branch
          %162 = sbr.rel (%p160) target = $region16
        $region15: #{tpu_custom_call.1} parent=11 // pred_region
          %s163 = smul.u32 2, %s27
          %165 = vsyncadd [#allocation7], 0
          %s166 = scalar_lea.hbm %s2, %s163
          %s168 = sshll.u32 %s166, 4
          %s169 = int_to_ptr.hbm [resolvable:$true] %s168
          %s170 = sshll.u32 [#allocation8], 4
          %s171 = int_to_ptr.vmem [resolvable:$true] %s170
          %173 = dma.hbm_to_vmem [thread:$0]  %s169, 32, %s171, [#allocation7]
        $region16: #{tpu_custom_call.1} parent=11 // pred_fallthru
          _
      $region12: #{tpu_custom_call.1} parent=5 // pred_fallthru
        _
      %p174 = scmp.lt.s32.totalorder %s16, 7
      // Predicated region
      $region17: #{tpu_custom_call.1} parent=5 // pred_check
        %p175 = pneg %p174
      $region18: #{tpu_custom_call.1} parent=5 // pred_check_branch
        %177 = sbr.rel (%p175) target = $region20
      $region19: #{tpu_custom_call.1} parent=5 // pred_region
        // Predicated region
        $region21: #{tpu_custom_call.1} parent=19 // pred_check
          %p178 = pneg %p57
        $region22: #{tpu_custom_call.1} parent=19 // pred_check_branch
          %180 = sbr.rel (%p178) target = $region24
        $region23: #{tpu_custom_call.1} parent=19 // pred_region
          %s181 = sand.u32 %s47, 1
          %s182 = scalar_lea.sflag [#allocation4], %s181
          %s183 = sand.u32 %s47, 1
          %s184 = smul.addr %s183, 14
          %s185 = scalar_lea.vmem [#allocation3], %s184
          %s186 = smul.u32 7, %s25
          %188 = vsyncadd %s182, 0
          %s189 = smul.addr %s23, 49
          %s190 = sadd.s32 %s186, %s189
          %s191 = smul.addr %s190, 2
          %s192 = scalar_lea.hbm %s0, %s191
          %s194 = sshll.u32 %s192, 4
          %s195 = int_to_ptr.hbm [resolvable:$true] %s194
          %s196 = sshll.u32 %s185, 4
          %s197 = int_to_ptr.vmem [resolvable:$true] %s196
          %199 = dma.hbm_to_vmem [thread:$0]  %s195, 224, %s197, %s182
        $region24: #{tpu_custom_call.1} parent=19 // pred_fallthru
          _
        // Predicated region
        $region25: #{tpu_custom_call.1} parent=19 // pred_check
          %p200 = pneg %p85
        $region26: #{tpu_custom_call.1} parent=19 // pred_check_branch
          %202 = sbr.rel (%p200) target = $region28
        $region27: #{tpu_custom_call.1} parent=19 // pred_region
          %s203 = sand.u32 %s16, 1
          %s204 = scalar_lea.sflag [#allocation7], %s203
          %s205 = sand.u32 %s75, 1
          %s206 = smul.addr %s205, 1792
          %s207 = scalar_lea.vmem [#allocation6], %s206
          %s208 = smul.u32 112, %s25
          %s209 = smul.u32 2, %s24
          %211 = vsyncadd %s204, 0
          %s212 = smul.addr %s208, 2
          %s213 = sadd.s32 %s209, %s212
          %s214 = smul.addr %s213, 8
          %s215 = scalar_lea.hbm %s1, %s214
          %s216 = sshll.u32 %s215, 4
          %s217 = int_to_ptr.hbm [resolvable:$true] %s216
          %s218 = sshll.u32 %s207, 4
          %s219 = int_to_ptr.vmem [resolvable:$true] %s218
          %224 = dma.hbm_to_vmem [thread:$0]  %s217, 28672, %s219, %s204, 256, 256, 16
        $region28: #{tpu_custom_call.1} parent=19 // pred_fallthru
          _
      $region20: #{tpu_custom_call.1} parent=5 // pred_fallthru
        _
      %p225 = scmp.le.s32.totalorder 1, %s16
      %p226 = scmp.lt.s32.totalorder %s16, 8
      %p227 = pnand %p225, %p226
      %p228 = pneg %p227
      // Predicated region
      $region29: #{tpu_custom_call.1} parent=5 // pred_check
        _
      $region30: #{tpu_custom_call.1} parent=5 // pred_check_branch
        %230 = sbr.rel (%p227) target = $region32
      $region31: #{tpu_custom_call.1} parent=5 // pred_region
        %s231 = ssub.s32 %s16, 1
        %s232 = sand.u32 %s50, 1
        %s233 = scalar_lea.sflag [#allocation4], %s232
        %s234 = sand.u32 %s50, 1
        %s235 = smul.addr %s234, 14
        %s236 = scalar_lea.vmem [#allocation3], %s235
        // Predicated region
        $region33: #{tpu_custom_call.1} parent=31 // pred_check
          %p237 = pneg %p63
        $region34: #{tpu_custom_call.1} parent=31 // pred_check_branch
          %239 = sbr.rel (%p237) target = $region36
        $region35: #{tpu_custom_call.1} parent=31 // pred_region
          %241 = dma.done %s233, 224
        $region36: #{tpu_custom_call.1} parent=31 // pred_fallthru
          _
        %s242 = sand.u32 %s21, 1
        %s243 = scalar_lea.sflag [#allocation7], %s242
        %s244 = sand.u32 %s78, 1
        %s245 = smul.addr %s244, 1792
        %s246 = scalar_lea.vmem [#allocation6], %s245
        // Predicated region
        $region37: #{tpu_custom_call.1} parent=31 // pred_check
          %p247 = pneg %p91
        $region38: #{tpu_custom_call.1} parent=31 // pred_check_branch
          %249 = sbr.rel (%p247) target = $region40
        $region39: #{tpu_custom_call.1} parent=31 // pred_region
          %251 = dma.done %s243, 28672
        $region40: #{tpu_custom_call.1} parent=31 // pred_fallthru
          _
        // Predicated region
        $region41: #{tpu_custom_call.1} parent=31 // pred_check
          %p252 = pneg %p117
        $region42: #{tpu_custom_call.1} parent=31 // pred_check_branch
          %254 = sbr.rel (%p252) target = $region44
        $region43: #{tpu_custom_call.1} parent=31 // pred_region
          %256 = dma.done [#allocation7], 32
        $region44: #{tpu_custom_call.1} parent=31 // pred_fallthru
          _
        %s257 = sand.u32 %s50, 1
        %s258 = scalar_lea.sflag [#allocation4], %s257
        %s259 = sand.u32 %s50, 1
        %s260 = smul.addr %s259, 14
        %s261 = scalar_lea.vmem [#allocation3], %s260
        %p262 = pneg %p63
        %p263 = pneg %p60
        %s264 = sand.u32 %s21, 1
        %s265 = scalar_lea.sflag [#allocation7], %s264
        %s266 = sand.u32 %s78, 1
        %s267 = smul.addr %s266, 1792
        %s268 = scalar_lea.vmem [#allocation6], %s267
        %p269 = pneg %p91
        %p270 = pneg %p88
        %p271 = pneg %p117
        %p272 = pneg %p114
        %p273 = pneg %p145
        %p274 = pneg %p142
        %s275 = smul.u32 7, %s28
        %s276 = smul.u32 112, %s28
        %s277 = smul.u32 2, %s27
        %s278 = smul.u32 2, %s27
        %s279 = smul.u32 2, %s27
        %p280 = scmp.eq.s32.totalorder %s28, 0
        // Predicated region
        $region45: #{tpu_custom_call.1} parent=31 // pred_check
          %p281 = pneg %p280
        $region46: #{tpu_custom_call.1} parent=31 // pred_check_branch
          %283 = sbr.rel (%p281) target = $region48
        $region47: #{tpu_custom_call.1} parent=31 // pred_region
          %284 = vst [vmem:[#allocation2] sm:$0xf] 0.0
        $region48: #{tpu_custom_call.1} parent=31 // pred_fallthru
          _
        %v285 = vld [vmem:[#allocation2] sm:$0xf]
        %v286 = vld [vmem:[%s236] sm:$0xff]
        %v287 = vld [vmem:[%s236 + $0x8] sm:$0x3f]
        %v288 = vld [vmem:[%s246] sm:$0xff]
        %v289 = vld [vmem:[%s246 + $0x8] sm:$0xff]
        %v290 = vld [vmem:[%s246 + $0x10] sm:$0xff]
        %v291 = vld [vmem:[%s246 + $0x18] sm:$0xff]
        %v292 = vld [vmem:[%s246 + $0x20] sm:$0xff]
        %v293 = vld [vmem:[%s246 + $0x28] sm:$0xff]
        %v294 = vld [vmem:[%s246 + $0x30] sm:$0xff]
        %v295 = vld [vmem:[%s246 + $0x38] sm:$0xff]
        %v296 = vld [vmem:[%s246 + $0x40] sm:$0xff]
        %v297 = vld [vmem:[%s246 + $0x48] sm:$0xff]
        %v298 = vld [vmem:[%s246 + $0x50] sm:$0xff]
        %v299 = vld [vmem:[%s246 + $0x58] sm:$0xff]
        %v300 = vld [vmem:[%s246 + $0x60] sm:$0xff]
        %v301 = vld [vmem:[%s246 + $0x68] sm:$0xff]
        %v302 = vld [vmem:[%s246 + $0x70] sm:$0xff]
        %v303 = vld [vmem:[%s246 + $0x78] sm:$0xff]
        %v304 = vld [vmem:[%s246 + $0x80] sm:$0xff]
        %v305 = vld [vmem:[%s246 + $0x88] sm:$0xff]
        %v306 = vld [vmem:[%s246 + $0x90] sm:$0xff]
        %v307 = vld [vmem:[%s246 + $0x98] sm:$0xff]
        %v308 = vld [vmem:[%s246 + $0xa0] sm:$0xff]
        %v309 = vld [vmem:[%s246 + $0xa8] sm:$0xff]
        %v310 = vld [vmem:[%s246 + $0xb0] sm:$0xff]
        %v311 = vld [vmem:[%s246 + $0xb8] sm:$0xff]
        %v312 = vld [vmem:[%s246 + $0xc0] sm:$0xff]
        %v313 = vld [vmem:[%s246 + $0xc8] sm:$0xff]
        %v314 = vld [vmem:[%s246 + $0xd0] sm:$0xff]
        %v315 = vld [vmem:[%s246 + $0xd8] sm:$0xff]
        %v316 = vld [vmem:[%s246 + $0xe0] sm:$0xff]
        %v317 = vld [vmem:[%s246 + $0xe8] sm:$0xff]
        %v318 = vld [vmem:[%s246 + $0xf0] sm:$0xff]
        %v319 = vld [vmem:[%s246 + $0xf8] sm:$0xff]
        %v320 = vld [vmem:[%s246 + $0x100] sm:$0xff]
        %v321 = vld [vmem:[%s246 + $0x108] sm:$0xff]
        %v322 = vld [vmem:[%s246 + $0x110] sm:$0xff]
        %v323 = vld [vmem:[%s246 + $0x118] sm:$0xff]
        %v324 = vld [vmem:[%s246 + $0x120] sm:$0xff]
        %v325 = vld [vmem:[%s246 + $0x128] sm:$0xff]
        %v326 = vld [vmem:[%s246 + $0x130] sm:$0xff]
        %v327 = vld [vmem:[%s246 + $0x138] sm:$0xff]
        %v328 = vld [vmem:[%s246 + $0x140] sm:$0xff]
        %v329 = vld [vmem:[%s246 + $0x148] sm:$0xff]
        %v330 = vld [vmem:[%s246 + $0x150] sm:$0xff]
        %v331 = vld [vmem:[%s246 + $0x158] sm:$0xff]
        %v332 = vld [vmem:[%s246 + $0x160] sm:$0xff]
        %v333 = vld [vmem:[%s246 + $0x168] sm:$0xff]
        %v334 = vld [vmem:[%s246 + $0x170] sm:$0xff]
        %v335 = vld [vmem:[%s246 + $0x178] sm:$0xff]
        %v336 = vld [vmem:[%s246 + $0x180] sm:$0xff]
        %v337 = vld [vmem:[%s246 + $0x188] sm:$0xff]
        %v338 = vld [vmem:[%s246 + $0x190] sm:$0xff]
        %v339 = vld [vmem:[%s246 + $0x198] sm:$0xff]
        %v340 = vld [vmem:[%s246 + $0x1a0] sm:$0xff]
        %v341 = vld [vmem:[%s246 + $0x1a8] sm:$0xff]
        %v342 = vld [vmem:[%s246 + $0x1b0] sm:$0xff]
        %v343 = vld [vmem:[%s246 + $0x1b8] sm:$0xff]
        %v344 = vld [vmem:[%s246 + $0x1c0] sm:$0xff]
        %v345 = vld [vmem:[%s246 + $0x1c8] sm:$0xff]
        %v346 = vld [vmem:[%s246 + $0x1d0] sm:$0xff]
        %v347 = vld [vmem:[%s246 + $0x1d8] sm:$0xff]
        %v348 = vld [vmem:[%s246 + $0x1e0] sm:$0xff]
        %v349 = vld [vmem:[%s246 + $0x1e8] sm:$0xff]
        %v350 = vld [vmem:[%s246 + $0x1f0] sm:$0xff]
        %v351 = vld [vmem:[%s246 + $0x1f8] sm:$0xff]
        %v352 = vld [vmem:[%s246 + $0x200] sm:$0xff]
        %v353 = vld [vmem:[%s246 + $0x208] sm:$0xff]
        %v354 = vld [vmem:[%s246 + $0x210] sm:$0xff]
        %v355 = vld [vmem:[%s246 + $0x218] sm:$0xff]
        %v356 = vld [vmem:[%s246 + $0x220] sm:$0xff]
        %v357 = vld [vmem:[%s246 + $0x228] sm:$0xff]
        %v358 = vld [vmem:[%s246 + $0x230] sm:$0xff]
        %v359 = vld [vmem:[%s246 + $0x238] sm:$0xff]
        %v360 = vld [vmem:[%s246 + $0x240] sm:$0xff]
        %v361 = vld [vmem:[%s246 + $0x248] sm:$0xff]
        %v362 = vld [vmem:[%s246 + $0x250] sm:$0xff]
        %v363 = vld [vmem:[%s246 + $0x258] sm:$0xff]
        %v364 = vld [vmem:[%s246 + $0x260] sm:$0xff]
        %v365 = vld [vmem:[%s246 + $0x268] sm:$0xff]
        %v366 = vld [vmem:[%s246 + $0x270] sm:$0xff]
        %v367 = vld [vmem:[%s246 + $0x278] sm:$0xff]
        %v368 = vld [vmem:[%s246 + $0x280] sm:$0xff]
        %v369 = vld [vmem:[%s246 + $0x288] sm:$0xff]
        %v370 = vld [vmem:[%s246 + $0x290] sm:$0xff]
        %v371 = vld [vmem:[%s246 + $0x298] sm:$0xff]
        %v372 = vld [vmem:[%s246 + $0x2a0] sm:$0xff]
        %v373 = vld [vmem:[%s246 + $0x2a8] sm:$0xff]
        %v374 = vld [vmem:[%s246 + $0x2b0] sm:$0xff]
        %v375 = vld [vmem:[%s246 + $0x2b8] sm:$0xff]
        %v376 = vld [vmem:[%s246 + $0x2c0] sm:$0xff]
        %v377 = vld [vmem:[%s246 + $0x2c8] sm:$0xff]
        %v378 = vld [vmem:[%s246 + $0x2d0] sm:$0xff]
        %v379 = vld [vmem:[%s246 + $0x2d8] sm:$0xff]
        %v380 = vld [vmem:[%s246 + $0x2e0] sm:$0xff]
        %v381 = vld [vmem:[%s246 + $0x2e8] sm:$0xff]
        %v382 = vld [vmem:[%s246 + $0x2f0] sm:$0xff]
        %v383 = vld [vmem:[%s246 + $0x2f8] sm:$0xff]
        %v384 = vld [vmem:[%s246 + $0x300] sm:$0xff]
        %v385 = vld [vmem:[%s246 + $0x308] sm:$0xff]
        %v386 = vld [vmem:[%s246 + $0x310] sm:$0xff]
        %v387 = vld [vmem:[%s246 + $0x318] sm:$0xff]
        %v388 = vld [vmem:[%s246 + $0x320] sm:$0xff]
        %v389 = vld [vmem:[%s246 + $0x328] sm:$0xff]
        %v390 = vld [vmem:[%s246 + $0x330] sm:$0xff]
        %v391 = vld [vmem:[%s246 + $0x338] sm:$0xff]
        %v392 = vld [vmem:[%s246 + $0x340] sm:$0xff]
        %v393 = vld [vmem:[%s246 + $0x348] sm:$0xff]
        %v394 = vld [vmem:[%s246 + $0x350] sm:$0xff]
        %v395 = vld [vmem:[%s246 + $0x358] sm:$0xff]
        %v396 = vld [vmem:[%s246 + $0x360] sm:$0xff]
        %v397 = vld [vmem:[%s246 + $0x368] sm:$0xff]
        %v398 = vld [vmem:[%s246 + $0x370] sm:$0xff]
        %v399 = vld [vmem:[%s246 + $0x378] sm:$0xff]
        %v400 = vld [vmem:[%s246 + $0x380] sm:$0xff]
        %v401 = vld [vmem:[%s246 + $0x388] sm:$0xff]
        %v402 = vld [vmem:[%s246 + $0x390] sm:$0xff]
        %v403 = vld [vmem:[%s246 + $0x398] sm:$0xff]
        %v404 = vld [vmem:[%s246 + $0x3a0] sm:$0xff]
        %v405 = vld [vmem:[%s246 + $0x3a8] sm:$0xff]
        %v406 = vld [vmem:[%s246 + $0x3b0] sm:$0xff]
        %v407 = vld [vmem:[%s246 + $0x3b8] sm:$0xff]
        %v408 = vld [vmem:[%s246 + $0x3c0] sm:$0xff]
        %v409 = vld [vmem:[%s246 + $0x3c8] sm:$0xff]
        %v410 = vld [vmem:[%s246 + $0x3d0] sm:$0xff]
        %v411 = vld [vmem:[%s246 + $0x3d8] sm:$0xff]
        %v412 = vld [vmem:[%s246 + $0x3e0] sm:$0xff]
        %v413 = vld [vmem:[%s246 + $0x3e8] sm:$0xff]
        %v414 = vld [vmem:[%s246 + $0x3f0] sm:$0xff]
        %v415 = vld [vmem:[%s246 + $0x3f8] sm:$0xff]
        %v416 = vld [vmem:[%s246 + $0x400] sm:$0xff]
        %v417 = vld [vmem:[%s246 + $0x408] sm:$0xff]
        %v418 = vld [vmem:[%s246 + $0x410] sm:$0xff]
        %v419 = vld [vmem:[%s246 + $0x418] sm:$0xff]
        %v420 = vld [vmem:[%s246 + $0x420] sm:$0xff]
        %v421 = vld [vmem:[%s246 + $0x428] sm:$0xff]
        %v422 = vld [vmem:[%s246 + $0x430] sm:$0xff]
        %v423 = vld [vmem:[%s246 + $0x438] sm:$0xff]
        %v424 = vld [vmem:[%s246 + $0x440] sm:$0xff]
        %v425 = vld [vmem:[%s246 + $0x448] sm:$0xff]
        %v426 = vld [vmem:[%s246 + $0x450] sm:$0xff]
        %v427 = vld [vmem:[%s246 + $0x458] sm:$0xff]
        %v428 = vld [vmem:[%s246 + $0x460] sm:$0xff]
        %v429 = vld [vmem:[%s246 + $0x468] sm:$0xff]
        %v430 = vld [vmem:[%s246 + $0x470] sm:$0xff]
        %v431 = vld [vmem:[%s246 + $0x478] sm:$0xff]
        %v432 = vld [vmem:[%s246 + $0x480] sm:$0xff]
        %v433 = vld [vmem:[%s246 + $0x488] sm:$0xff]
        %v434 = vld [vmem:[%s246 + $0x490] sm:$0xff]
        %v435 = vld [vmem:[%s246 + $0x498] sm:$0xff]
        %v436 = vld [vmem:[%s246 + $0x4a0] sm:$0xff]
        %v437 = vld [vmem:[%s246 + $0x4a8] sm:$0xff]
        %v438 = vld [vmem:[%s246 + $0x4b0] sm:$0xff]
        %v439 = vld [vmem:[%s246 + $0x4b8] sm:$0xff]
        %v440 = vld [vmem:[%s246 + $0x4c0] sm:$0xff]
        %v441 = vld [vmem:[%s246 + $0x4c8] sm:$0xff]
        %v442 = vld [vmem:[%s246 + $0x4d0] sm:$0xff]
        %v443 = vld [vmem:[%s246 + $0x4d8] sm:$0xff]
        %v444 = vld [vmem:[%s246 + $0x4e0] sm:$0xff]
        %v445 = vld [vmem:[%s246 + $0x4e8] sm:$0xff]
        %v446 = vld [vmem:[%s246 + $0x4f0] sm:$0xff]
        %v447 = vld [vmem:[%s246 + $0x4f8] sm:$0xff]
        %v448 = vld [vmem:[%s246 + $0x500] sm:$0xff]
        %v449 = vld [vmem:[%s246 + $0x508] sm:$0xff]
        %v450 = vld [vmem:[%s246 + $0x510] sm:$0xff]
        %v451 = vld [vmem:[%s246 + $0x518] sm:$0xff]
        %v452 = vld [vmem:[%s246 + $0x520] sm:$0xff]
        %v453 = vld [vmem:[%s246 + $0x528] sm:$0xff]
        %v454 = vld [vmem:[%s246 + $0x530] sm:$0xff]
        %v455 = vld [vmem:[%s246 + $0x538] sm:$0xff]
        %v456 = vld [vmem:[%s246 + $0x540] sm:$0xff]
        %v457 = vld [vmem:[%s246 + $0x548] sm:$0xff]
        %v458 = vld [vmem:[%s246 + $0x550] sm:$0xff]
        %v459 = vld [vmem:[%s246 + $0x558] sm:$0xff]
        %v460 = vld [vmem:[%s246 + $0x560] sm:$0xff]
        %v461 = vld [vmem:[%s246 + $0x568] sm:$0xff]
        %v462 = vld [vmem:[%s246 + $0x570] sm:$0xff]
        %v463 = vld [vmem:[%s246 + $0x578] sm:$0xff]
        %v464 = vld [vmem:[%s246 + $0x580] sm:$0xff]
        %v465 = vld [vmem:[%s246 + $0x588] sm:$0xff]
        %v466 = vld [vmem:[%s246 + $0x590] sm:$0xff]
        %v467 = vld [vmem:[%s246 + $0x598] sm:$0xff]
        %v468 = vld [vmem:[%s246 + $0x5a0] sm:$0xff]
        %v469 = vld [vmem:[%s246 + $0x5a8] sm:$0xff]
        %v470 = vld [vmem:[%s246 + $0x5b0] sm:$0xff]
        %v471 = vld [vmem:[%s246 + $0x5b8] sm:$0xff]
        %v472 = vld [vmem:[%s246 + $0x5c0] sm:$0xff]
        %v473 = vld [vmem:[%s246 + $0x5c8] sm:$0xff]
        %v474 = vld [vmem:[%s246 + $0x5d0] sm:$0xff]
        %v475 = vld [vmem:[%s246 + $0x5d8] sm:$0xff]
        %v476 = vld [vmem:[%s246 + $0x5e0] sm:$0xff]
        %v477 = vld [vmem:[%s246 + $0x5e8] sm:$0xff]
        %v478 = vld [vmem:[%s246 + $0x5f0] sm:$0xff]
        %v479 = vld [vmem:[%s246 + $0x5f8] sm:$0xff]
        %v480 = vld [vmem:[%s246 + $0x600] sm:$0xff]
        %v481 = vld [vmem:[%s246 + $0x608] sm:$0xff]
        %v482 = vld [vmem:[%s246 + $0x610] sm:$0xff]
        %v483 = vld [vmem:[%s246 + $0x618] sm:$0xff]
        %v484 = vld [vmem:[%s246 + $0x620] sm:$0xff]
        %v485 = vld [vmem:[%s246 + $0x628] sm:$0xff]
        %v486 = vld [vmem:[%s246 + $0x630] sm:$0xff]
        %v487 = vld [vmem:[%s246 + $0x638] sm:$0xff]
        %v488 = vld [vmem:[%s246 + $0x640] sm:$0xff]
        %v489 = vld [vmem:[%s246 + $0x648] sm:$0xff]
        %v490 = vld [vmem:[%s246 + $0x650] sm:$0xff]
        %v491 = vld [vmem:[%s246 + $0x658] sm:$0xff]
        %v492 = vld [vmem:[%s246 + $0x660] sm:$0xff]
        %v493 = vld [vmem:[%s246 + $0x668] sm:$0xff]
        %v494 = vld [vmem:[%s246 + $0x670] sm:$0xff]
        %v495 = vld [vmem:[%s246 + $0x678] sm:$0xff]
        %v496 = vld [vmem:[%s246 + $0x680] sm:$0xff]
        %v497 = vld [vmem:[%s246 + $0x688] sm:$0xff]
        %v498 = vld [vmem:[%s246 + $0x690] sm:$0xff]
        %v499 = vld [vmem:[%s246 + $0x698] sm:$0xff]
        %v500 = vld [vmem:[%s246 + $0x6a0] sm:$0xff]
        %v501 = vld [vmem:[%s246 + $0x6a8] sm:$0xff]
        %v502 = vld [vmem:[%s246 + $0x6b0] sm:$0xff]
        %v503 = vld [vmem:[%s246 + $0x6b8] sm:$0xff]
        %v504 = vld [vmem:[%s246 + $0x6c0] sm:$0xff]
        %v505 = vld [vmem:[%s246 + $0x6c8] sm:$0xff]
        %v506 = vld [vmem:[%s246 + $0x6d0] sm:$0xff]
        %v507 = vld [vmem:[%s246 + $0x6d8] sm:$0xff]
        %v508 = vld [vmem:[%s246 + $0x6e0] sm:$0xff]
        %v509 = vld [vmem:[%s246 + $0x6e8] sm:$0xff]
        %v510 = vld [vmem:[%s246 + $0x6f0] sm:$0xff]
        %v511 = vld [vmem:[%s246 + $0x6f8] sm:$0xff]
        %514 = vst [vmem:[#allocation1] ss:$4 sm:$0xff] %v286
        %s515 = scalar_lea.vmem [#allocation1], 32
        %516 = vst [vmem:[%s515] ss:$4 sm:$0xff] %v287
        %v517 = vld.sshfl [vmem:[#allocation1] sm:$0xff pattern:$0x73625140]
        %v518 = vld.sshfl [vmem:[#allocation1 + $0x8] sm:$0xff pattern:$0x73625140]
        %v519 = vld.sshfl [vmem:[#allocation1 + $0x10] sm:$0xff pattern:$0x73625140]
        %v520 = vld.sshfl [vmem:[#allocation1 + $0x18] sm:$0xff pattern:$0x73625140]
        %v521 = vld.sshfl [vmem:[#allocation1 + $0x20] sm:$0xff pattern:$0x73625140]
        %v522 = vld.sshfl [vmem:[#allocation1 + $0x28] sm:$0xff pattern:$0x73625140]
        %v523 = vld.sshfl [vmem:[#allocation1 + $0x30] sm:$0xff pattern:$0x73625140]
        %531 = vmatpush.msra.mxu0 %v318
        %532 = vmatpush.msra.mxu0 %v316
        %533 = vmatpush.msra.mxu0 %v314
        %534 = vmatpush.msra.mxu0 %v312
        %535 = vmatpush.msra.mxu0 %v310
        %536 = vmatpush.msra.mxu0 %v308
        %537 = vmatpush.msra.mxu0 %v306
        %538 = vmatpush.msra.mxu0 %v304
        %539 = vmatpush.msra.mxu0 %v302
        %540 = vmatpush.msra.mxu0 %v300
        %541 = vmatpush.msra.mxu0 %v298
        %542 = vmatpush.msra.mxu0 %v296
        %543 = vmatpush.msra.mxu0 %v294
        %544 = vmatpush.msra.mxu0 %v292
        %545 = vmatpush.msra.mxu0 %v290
        %546 = vmatpush.msra.mxu0 %v288
        %547 = vmatmul.f32.gmra.mxu0 %v517
        %v548 = vpop.f32.mrf.mxu0
        %v549 = vadd.f32 0.0, %v548
        %550 = vdwg.mxu0
        %551 = vmatpush.msra.mxu0 %v350
        %552 = vmatpush.msra.mxu0 %v348
        %553 = vmatpush.msra.mxu0 %v346
        %554 = vmatpush.msra.mxu0 %v344
        %555 = vmatpush.msra.mxu0 %v342
        %556 = vmatpush.msra.mxu0 %v340
        %557 = vmatpush.msra.mxu0 %v338
        %558 = vmatpush.msra.mxu0 %v336
        %559 = vmatpush.msra.mxu0 %v334
        %560 = vmatpush.msra.mxu0 %v332
        %561 = vmatpush.msra.mxu0 %v330
        %562 = vmatpush.msra.mxu0 %v328
        %563 = vmatpush.msra.mxu0 %v326
        %564 = vmatpush.msra.mxu0 %v324
        %565 = vmatpush.msra.mxu0 %v322
        %566 = vmatpush.msra.mxu0 %v320
        %567 = vmatmul.f32.gmra.mxu0 %v518
        %v568 = vpop.f32.mrf.mxu0
        %v569 = vadd.f32 %v549, %v568
        %570 = vdwg.mxu0
        %571 = vmatpush.msra.mxu0 %v382
        %572 = vmatpush.msra.mxu0 %v380
        %573 = vmatpush.msra.mxu0 %v378
        %574 = vmatpush.msra.mxu0 %v376
        %575 = vmatpush.msra.mxu0 %v374
        %576 = vmatpush.msra.mxu0 %v372
        %577 = vmatpush.msra.mxu0 %v370
        %578 = vmatpush.msra.mxu0 %v368
        %579 = vmatpush.msra.mxu0 %v366
        %580 = vmatpush.msra.mxu0 %v364
        %581 = vmatpush.msra.mxu0 %v362
        %582 = vmatpush.msra.mxu0 %v360
        %583 = vmatpush.msra.mxu0 %v358
        %584 = vmatpush.msra.mxu0 %v356
        %585 = vmatpush.msra.mxu0 %v354
        %586 = vmatpush.msra.mxu0 %v352
        %587 = vmatmul.f32.gmra.mxu0 %v519
        %v588 = vpop.f32.mrf.mxu0
        %v589 = vadd.f32 %v569, %v588
        %590 = vdwg.mxu0
        %591 = vmatpush.msra.mxu0 %v414
        %592 = vmatpush.msra.mxu0 %v412
        %593 = vmatpush.msra.mxu0 %v410
        %594 = vmatpush.msra.mxu0 %v408
        %595 = vmatpush.msra.mxu0 %v406
        %596 = vmatpush.msra.mxu0 %v404
        %597 = vmatpush.msra.mxu0 %v402
        %598 = vmatpush.msra.mxu0 %v400
        %599 = vmatpush.msra.mxu0 %v398
        %600 = vmatpush.msra.mxu0 %v396
        %601 = vmatpush.msra.mxu0 %v394
        %602 = vmatpush.msra.mxu0 %v392
        %603 = vmatpush.msra.mxu0 %v390
        %604 = vmatpush.msra.mxu0 %v388
        %605 = vmatpush.msra.mxu0 %v386
        %606 = vmatpush.msra.mxu0 %v384
        %607 = vmatmul.f32.gmra.mxu0 %v520
        %v608 = vpop.f32.mrf.mxu0
        %v609 = vadd.f32 %v589, %v608
        %610 = vdwg.mxu0
        %611 = vmatpush.msra.mxu0 %v446
        %612 = vmatpush.msra.mxu0 %v444
        %613 = vmatpush.msra.mxu0 %v442
        %614 = vmatpush.msra.mxu0 %v440
        %615 = vmatpush.msra.mxu0 %v438
        %616 = vmatpush.msra.mxu0 %v436
        %617 = vmatpush.msra.mxu0 %v434
        %618 = vmatpush.msra.mxu0 %v432
        %619 = vmatpush.msra.mxu0 %v430
        %620 = vmatpush.msra.mxu0 %v428
        %621 = vmatpush.msra.mxu0 %v426
        %622 = vmatpush.msra.mxu0 %v424
        %623 = vmatpush.msra.mxu0 %v422
        %624 = vmatpush.msra.mxu0 %v420
        %625 = vmatpush.msra.mxu0 %v418
        %626 = vmatpush.msra.mxu0 %v416
        %627 = vmatmul.f32.gmra.mxu0 %v521
        %v628 = vpop.f32.mrf.mxu0
        %v629 = vadd.f32 %v609, %v628
        %630 = vdwg.mxu0
        %631 = vmatpush.msra.mxu0 %v478
        %632 = vmatpush.msra.mxu0 %v476
        %633 = vmatpush.msra.mxu0 %v474
        %634 = vmatpush.msra.mxu0 %v472
        %635 = vmatpush.msra.mxu0 %v470
        %636 = vmatpush.msra.mxu0 %v468
        %637 = vmatpush.msra.mxu0 %v466
        %638 = vmatpush.msra.mxu0 %v464
        %639 = vmatpush.msra.mxu0 %v462
        %640 = vmatpush.msra.mxu0 %v460
        %641 = vmatpush.msra.mxu0 %v458
        %642 = vmatpush.msra.mxu0 %v456
        %643 = vmatpush.msra.mxu0 %v454
        %644 = vmatpush.msra.mxu0 %v452
        %645 = vmatpush.msra.mxu0 %v450
        %646 = vmatpush.msra.mxu0 %v448
        %647 = vmatmul.f32.gmra.mxu0 %v522
        %v648 = vpop.f32.mrf.mxu0
        %v649 = vadd.f32 %v629, %v648
        %650 = vdwg.mxu0
        %651 = vmatpush.msra.mxu0 %v510
        %652 = vmatpush.msra.mxu0 %v508
        %653 = vmatpush.msra.mxu0 %v506
        %654 = vmatpush.msra.mxu0 %v504
        %655 = vmatpush.msra.mxu0 %v502
        %656 = vmatpush.msra.mxu0 %v500
        %657 = vmatpush.msra.mxu0 %v498
        %658 = vmatpush.msra.mxu0 %v496
        %659 = vmatpush.msra.mxu0 %v494
        %660 = vmatpush.msra.mxu0 %v492
        %661 = vmatpush.msra.mxu0 %v490
        %662 = vmatpush.msra.mxu0 %v488
        %663 = vmatpush.msra.mxu0 %v486
        %664 = vmatpush.msra.mxu0 %v484
        %665 = vmatpush.msra.mxu0 %v482
        %666 = vmatpush.msra.mxu0 %v480
        %667 = vmatmul.f32.gmra.mxu0 %v523
        %v668 = vpop.f32.mrf.mxu0
        %v669 = vadd.f32 %v649, %v668
        %670 = vdwg.mxu0
        %671 = vmatpush.msra.mxu0 %v319
        %672 = vmatpush.msra.mxu0 %v317
        %673 = vmatpush.msra.mxu0 %v315
        %674 = vmatpush.msra.mxu0 %v313
        %675 = vmatpush.msra.mxu0 %v311
        %676 = vmatpush.msra.mxu0 %v309
        %677 = vmatpush.msra.mxu0 %v307
        %678 = vmatpush.msra.mxu0 %v305
        %679 = vmatpush.msra.mxu0 %v303
        %680 = vmatpush.msra.mxu0 %v301
        %681 = vmatpush.msra.mxu0 %v299
        %682 = vmatpush.msra.mxu0 %v297
        %683 = vmatpush.msra.mxu0 %v295
        %684 = vmatpush.msra.mxu0 %v293
        %685 = vmatpush.msra.mxu0 %v291
        %686 = vmatpush.msra.mxu0 %v289
        %687 = vmatmul.f32.gmra.mxu0 %v517
        %v688 = vpop.f32.mrf.mxu0
        %v689 = vadd.f32 0.0, %v688
        %690 = vdwg.mxu0
        %691 = vmatpush.msra.mxu0 %v351
        %692 = vmatpush.msra.mxu0 %v349
        %693 = vmatpush.msra.mxu0 %v347
        %694 = vmatpush.msra.mxu0 %v345
        %695 = vmatpush.msra.mxu0 %v343
        %696 = vmatpush.msra.mxu0 %v341
        %697 = vmatpush.msra.mxu0 %v339
        %698 = vmatpush.msra.mxu0 %v337
        %699 = vmatpush.msra.mxu0 %v335
        %700 = vmatpush.msra.mxu0 %v333
        %701 = vmatpush.msra.mxu0 %v331
        %702 = vmatpush.msra.mxu0 %v329
        %703 = vmatpush.msra.mxu0 %v327
        %704 = vmatpush.msra.mxu0 %v325
        %705 = vmatpush.msra.mxu0 %v323
        %706 = vmatpush.msra.mxu0 %v321
        %707 = vmatmul.f32.gmra.mxu0 %v518
        %v708 = vpop.f32.mrf.mxu0
        %v709 = vadd.f32 %v689, %v708
        %710 = vdwg.mxu0
        %711 = vmatpush.msra.mxu0 %v383
        %712 = vmatpush.msra.mxu0 %v381
        %713 = vmatpush.msra.mxu0 %v379
        %714 = vmatpush.msra.mxu0 %v377
        %715 = vmatpush.msra.mxu0 %v375
        %716 = vmatpush.msra.mxu0 %v373
        %717 = vmatpush.msra.mxu0 %v371
        %718 = vmatpush.msra.mxu0 %v369
        %719 = vmatpush.msra.mxu0 %v367
        %720 = vmatpush.msra.mxu0 %v365
        %721 = vmatpush.msra.mxu0 %v363
        %722 = vmatpush.msra.mxu0 %v361
        %723 = vmatpush.msra.mxu0 %v359
        %724 = vmatpush.msra.mxu0 %v357
        %725 = vmatpush.msra.mxu0 %v355
        %726 = vmatpush.msra.mxu0 %v353
        %727 = vmatmul.f32.gmra.mxu0 %v519
        %v728 = vpop.f32.mrf.mxu0
        %v729 = vadd.f32 %v709, %v728
        %730 = vdwg.mxu0
        %731 = vmatpush.msra.mxu0 %v415
        %732 = vmatpush.msra.mxu0 %v413
        %733 = vmatpush.msra.mxu0 %v411
        %734 = vmatpush.msra.mxu0 %v409
        %735 = vmatpush.msra.mxu0 %v407
        %736 = vmatpush.msra.mxu0 %v405
        %737 = vmatpush.msra.mxu0 %v403
        %738 = vmatpush.msra.mxu0 %v401
        %739 = vmatpush.msra.mxu0 %v399
        %740 = vmatpush.msra.mxu0 %v397
        %741 = vmatpush.msra.mxu0 %v395
        %742 = vmatpush.msra.mxu0 %v393
        %743 = vmatpush.msra.mxu0 %v391
        %744 = vmatpush.msra.mxu0 %v389
        %745 = vmatpush.msra.mxu0 %v387
        %746 = vmatpush.msra.mxu0 %v385
        %747 = vmatmul.f32.gmra.mxu0 %v520
        %v748 = vpop.f32.mrf.mxu0
        %v749 = vadd.f32 %v729, %v748
        %750 = vdwg.mxu0
        %751 = vmatpush.msra.mxu0 %v447
        %752 = vmatpush.msra.mxu0 %v445
        %753 = vmatpush.msra.mxu0 %v443
        %754 = vmatpush.msra.mxu0 %v441
        %755 = vmatpush.msra.mxu0 %v439
        %756 = vmatpush.msra.mxu0 %v437
        %757 = vmatpush.msra.mxu0 %v435
        %758 = vmatpush.msra.mxu0 %v433
        %759 = vmatpush.msra.mxu0 %v431
        %760 = vmatpush.msra.mxu0 %v429
        %761 = vmatpush.msra.mxu0 %v427
        %762 = vmatpush.msra.mxu0 %v425
        %763 = vmatpush.msra.mxu0 %v423
        %764 = vmatpush.msra.mxu0 %v421
        %765 = vmatpush.msra.mxu0 %v419
        %766 = vmatpush.msra.mxu0 %v417
        %767 = vmatmul.f32.gmra.mxu0 %v521
        %v768 = vpop.f32.mrf.mxu0
        %v769 = vadd.f32 %v749, %v768
        %770 = vdwg.mxu0
        %771 = vmatpush.msra.mxu0 %v479
        %772 = vmatpush.msra.mxu0 %v477
        %773 = vmatpush.msra.mxu0 %v475
        %774 = vmatpush.msra.mxu0 %v473
        %775 = vmatpush.msra.mxu0 %v471
        %776 = vmatpush.msra.mxu0 %v469
        %777 = vmatpush.msra.mxu0 %v467
        %778 = vmatpush.msra.mxu0 %v465
        %779 = vmatpush.msra.mxu0 %v463
        %780 = vmatpush.msra.mxu0 %v461
        %781 = vmatpush.msra.mxu0 %v459
        %782 = vmatpush.msra.mxu0 %v457
        %783 = vmatpush.msra.mxu0 %v455
        %784 = vmatpush.msra.mxu0 %v453
        %785 = vmatpush.msra.mxu0 %v451
        %786 = vmatpush.msra.mxu0 %v449
        %787 = vmatmul.f32.gmra.mxu0 %v522
        %v788 = vpop.f32.mrf.mxu0
        %v789 = vadd.f32 %v769, %v788
        %790 = vdwg.mxu0
        %791 = vmatpush.msra.mxu0 %v511
        %792 = vmatpush.msra.mxu0 %v509
        %793 = vmatpush.msra.mxu0 %v507
        %794 = vmatpush.msra.mxu0 %v505
        %795 = vmatpush.msra.mxu0 %v503
        %796 = vmatpush.msra.mxu0 %v501
        %797 = vmatpush.msra.mxu0 %v499
        %798 = vmatpush.msra.mxu0 %v497
        %799 = vmatpush.msra.mxu0 %v495
        %800 = vmatpush.msra.mxu0 %v493
        %801 = vmatpush.msra.mxu0 %v491
        %802 = vmatpush.msra.mxu0 %v489
        %803 = vmatpush.msra.mxu0 %v487
        %804 = vmatpush.msra.mxu0 %v485
        %805 = vmatpush.msra.mxu0 %v483
        %806 = vmatpush.msra.mxu0 %v481
        %807 = vmatmul.f32.gmra.mxu0 %v523
        %v808 = vpop.f32.mrf.mxu0
        %v809 = vadd.f32 %v789, %v808
        %810 = vdwg.mxu0
        %v813 = vrot.slane %v809, 6
        %vm814 = vcmask 1041408
        %v815 = vsel %vm814, %v669, %v813
        %v817 = vadd.f32 %v285, %v815
        %818 = vst [vmem:[#allocation2] sm:$0xf] %v817
        %p819 = scmp.eq.s32.totalorder %s28, 6
        // Predicated region
        $region49: #{tpu_custom_call.1} parent=31 // pred_check
          %p820 = pneg %p819
        $region50: #{tpu_custom_call.1} parent=31 // pred_check_branch
          %822 = sbr.rel (%p820) target = $region52
        $region51: #{tpu_custom_call.1} parent=31 // pred_region
          %v823 = vld [vmem:[#allocation2] sm:$0xf]
          %v824 = vld [vmem:[#allocation8] sm:$0x3]
          %v826 = vperm.slane %v824, 0
          %v827 = vperm.slane %v824, 1
          %v828 = vrot.slane %v827, 6
          %v829 = vsel %vm814, %v826, %v828
          %v831 = vadd.f32 %v823, %v829
          %v832 = vtanh.pop %v831
          %833 = vst [vmem:[#allocation9] sm:$0xf] %v832
        $region52: #{tpu_custom_call.1} parent=31 // pred_fallthru
          _
        // Predicated region
        $region53: #{tpu_custom_call.1} parent=31 // pred_check
          %p834 = pneg %p142
        $region54: #{tpu_custom_call.1} parent=31 // pred_check_branch
          %836 = sbr.rel (%p834) target = $region56
        $region55: #{tpu_custom_call.1} parent=31 // pred_region
          %s837 = smul.u32 2, %s27
          %839 = vsyncadd [#allocation5], 0
          %s840 = smul.addr %s26, 2
          %s841 = sadd.s32 %s837, %s840
          %s842 = smul.addr %s841, 2
          %s843 = scalar_lea.hbm %s3, %s842
          %s845 = sshll.u32 [#allocation9], 4
          %s846 = int_to_ptr.vmem [resolvable:$true] %s845
          %s847 = sshll.u32 %s843, 4
          %s848 = int_to_ptr.hbm [resolvable:$true] %s847
          %850 = dma.vmem_to_hbm [thread:$0]  %s846, 64, %s848, [#allocation5]
        $region56: #{tpu_custom_call.1} parent=31 // pred_fallthru
          _
        // Predicated region
        $region57: #{tpu_custom_call.1} parent=31 // pred_check
          %p851 = pneg %p142
        $region58: #{tpu_custom_call.1} parent=31 // pred_check_branch
          %853 = sbr.rel (%p851) target = $region60
        $region59: #{tpu_custom_call.1} parent=31 // pred_region
          %855 = dma.done [#allocation5], 64
        $region60: #{tpu_custom_call.1} parent=31 // pred_fallthru
          _
      $region32: #{tpu_custom_call.1} parent=5 // pred_fallthru
        _
      %p856 = scmp.le.s32.totalorder 2, %s16
      // Predicated region
      $region61: #{tpu_custom_call.1} parent=5 // pred_check
        %p857 = pneg %p856
      $region62: #{tpu_custom_call.1} parent=5 // pred_check_branch
        %859 = sbr.rel (%p857) target = $region64
      $region63: #{tpu_custom_call.1} parent=5 // pred_region
        %s860 = ssub.s32 %s16, 2
      $region64: #{tpu_custom_call.1} parent=5 // pred_fallthru
        _
    $region6: #{tpu_custom_call.1} parent=1 // loop_footer
      %s20 = sadd.s32 1, %s16
    $region7: #{tpu_custom_call.1} parent=1 // loop_footer_branch
      %15 = sbr.rel target = $region3
    $region8: #{tpu_custom_call.1} parent=1 // loop_exit
      _
    %861 = vsyncpa [#allocation4], 1
    %s862 = scalar_lea.sflag [#allocation4], 1
    %863 = vsyncpa %s862, 1
    %864 = vsyncpa [#allocation7], 1
    %s865 = scalar_lea.sflag [#allocation7], 1
    %866 = vsyncpa %s865, 1
    %867 = vsyncpa [#allocation5], 1
    %s868 = scalar_lea.sflag [#allocation5], 1
    %869 = vsyncpa %s868, 1

</llo_original>
